<compile_context>
chip_gen: v6e
topology: v6e:2x2x1
jax: 0.10.0
libtpu: 0.0.40
codegen_flags: <defaults>
</compile_context>

<pallas_src>
import numpy as np
import jax
import jax.numpy as jnp
from jax import lax
from jax.experimental import pallas as pl
from jax.experimental.pallas import tpu as pltpu

GAMMA = 2.0  # focal-loss focusing parameter


def _make_loss_kernel(B, C, TB, gamma):
    inv_b = np.float32(1.0 / B)
    inv_bc = np.float32(1.0 / (B * C))
    ragged = (B % TB) != 0  # static: last tile reads past the batch edge

    def kernel(fc_ref, label_ref, l1_ref, out_ref):
        i = pl.program_id(0)

        @pl.when(i == 0)
        def _init():
            out_ref[0] = jnp.float32(0.0)   # running sum (l1 - count)^2
            out_ref[1] = jnp.float32(0.0)   # running sum focal elements
            out_ref[2] = jnp.float32(0.0)   # running sum agreement
            out_ref[3] = jnp.float32(0.0)   # total (filled at finalize)

        fc = fc_ref[...].astype(jnp.float32)        # [TB, C] logits
        label = label_ref[...].astype(jnp.float32)  # [TB, C] 0/1 targets
        l1 = l1_ref[...].astype(jnp.float32)        # [TB, 1] count regressor

        # ---- focal (shared-softplus form) & accuracy -----------------------
        s = fc * (label * 2.0 - 1.0)                  # x * (2y - 1)
        t = jnp.exp(-jnp.abs(s))                      # EUP 1
        sp = jnp.maximum(s, 0.0) + jnp.log1p(t)       # softplus(s)      EUP 2
        bce = sp - s                                  # == BCE-with-logits
        weight = jnp.exp(-gamma * sp)                 # == exp(g*logsigmoid(-s)) EUP 3
        focal_elem = weight * bce                     # [TB, C]

        agree = ((fc > 0.0) == (label > 0.5)).astype(jnp.float32)

        # ---- mse: (layer1_fc - label.byte().sum(1))^2 ----------------------
        counts = jnp.sum(jnp.trunc(label), axis=1, keepdims=True)   # [TB, 1]
        diff = l1 - counts

        if ragged:
            row0 = i * TB
            rows = lax.broadcasted_iota(jnp.int32, (TB, 1), 0) + row0
            valid = rows < B                          # [TB, 1] row mask
            focal_elem = jnp.where(valid, focal_elem, 0.0)
            agree = jnp.where(valid, agree, 0.0)
            diff = jnp.where(valid, diff, 0.0)

        out_ref[0] += jnp.sum(diff * diff)
        out_ref[1] += jnp.sum(focal_elem)
        out_ref[2] += jnp.sum(agree)

        @pl.when(i == pl.num_programs(0) - 1)
        def _finalize():
            mse = out_ref[0] * inv_b
            focal = out_ref[1] * inv_b
            acc = out_ref[2] * inv_bc
            out_ref[0] = mse
            out_ref[1] = focal
            out_ref[2] = acc
            out_ref[3] = focal + mse

    return kernel


def _choose_batch_tile(B, C, itemsize):
    """Largest batch tile s.t. 2 inputs x 2 pipeline buffers stay ~8 MiB
    (safe under the scoped-VMEM defaults on v5e/v6e/v7x)."""
    target_block_bytes = 2 * 1024 * 1024
    tb = target_block_bytes // max(1, C * itemsize)
    tb = max(8, (tb // 8) * 8)
    if tb >= B:
        return B   # single tile == full array -> no (8, .) divisibility needed
    return tb


def loss_v3(results, batch, epoch=0, *, tile_b=None):
    """Pallas TPU equivalent of Loss_v3.forward (epoch unused, as in PyTorch)."""
    del epoch
    fc = results["fc"]                          # [B, C] logits, native dtype
    l1 = results["layer1_fc"].reshape(-1, 1)    # [B, 1]
    label = batch["label"]                      # [B, C] multi-hot, native dtype

    B, C = fc.shape
    itemsize = jnp.dtype(fc.dtype).itemsize
    if tile_b is None:
        TB = _choose_batch_tile(B, C, itemsize)
    else:
        TB = max(8, (int(tile_b) // 8) * 8)
        TB = B if TB >= B else TB

    grid = (pl.cdiv(B, TB),)
    kernel = _make_loss_kernel(B, C, TB, GAMMA)

    cost = pl.CostEstimate(
        flops=16 * B * C + 4 * B,
        transcendentals=3 * B * C,
        bytes_accessed=(fc.size * jnp.dtype(fc.dtype).itemsize
                        + label.size * jnp.dtype(label.dtype).itemsize
                        + l1.size * jnp.dtype(l1.dtype).itemsize
                        + 16),
    )

    out = pl.pallas_call(
        kernel,
        out_shape=jax.ShapeDtypeStruct((4,), jnp.float32),
        grid_spec=pltpu.PrefetchScalarGridSpec(
            num_scalar_prefetch=0,
            grid=grid,
            in_specs=[
                pl.BlockSpec((TB, C), lambda i: (i, 0)),   # fc
                pl.BlockSpec((TB, C), lambda i: (i, 0)),   # label
                pl.BlockSpec((TB, 1), lambda i: (i, 0)),   # layer1_fc
            ],
            out_specs=pl.BlockSpec(memory_space=pltpu.MemorySpace.SMEM),
        ),
        compiler_params=pltpu.CompilerParams(
            dimension_semantics=("arbitrary",)),
        cost_estimate=cost,
    )(fc, label, l1)

    return {"mse": out[0], "focal": out[1], "acc": out[2], "total": out[3]}


def _reference(results, batch):
    """Pure-JAX reference matching the PyTorch semantics (original formulas)."""
    fc = results["fc"].astype(jnp.float32)
    l1 = results["layer1_fc"].astype(jnp.float32)
    label = batch["label"].astype(jnp.float32)

    target = jnp.sum(jnp.trunc(label), axis=1)
    mse = jnp.mean((l1 - target) ** 2)

    max_val = jnp.maximum(-fc, 0.0)
    bce = fc - fc * label + max_val + jnp.log(jnp.exp(-max_val) + jnp.exp(-fc - max_val))
    z = -fc * (label * 2.0 - 1.0)
    logsig = jnp.minimum(z, 0.0) - jnp.log1p(jnp.exp(-jnp.abs(z)))
    focal = jnp.mean(jnp.sum(jnp.exp(GAMMA * logsig) * bce, axis=1))

    acc = jnp.mean(((fc > 0.0) == (label > 0.5)).astype(jnp.float32))
    return {"mse": mse, "focal": focal, "acc": acc, "total": focal + mse}


if __name__ == "__main__":
    key = jax.random.PRNGKey(0)
    k1, k2, k3, k4, k5, k6 = jax.random.split(key, 6)

    # --- case 1: tiny single-tile f32 (matches the module's expected shapes) ---
    B, C = 4, 16
    fc = jax.random.normal(k1, (B, C), dtype=jnp.float32)               # logits
    layer1_fc = jax.random.normal(k2, (B,), dtype=jnp.float32) * 4.0    # count regressor
    label = (jax.random.uniform(k3, (B, C)) > 0.5).astype(jnp.float32)  # multi-hot

    results = {"fc": fc, "layer1_fc": layer1_fc}
    batch = {"label": label}

    out = jax.block_until_ready(loss_v3(results, batch, epoch=0))
    ref = _reference(results, batch)
    for name in ("mse", "focal", "acc", "total"):
        np.testing.assert_allclose(np.asarray(out[name]), np.asarray(ref[name]),
                                   rtol=1e-5, atol=1e-5)

    # --- case 2: multi-tile grid with ragged last tile, native bf16 inputs ----
    B2, C2 = 300, 24
    fc2 = jax.random.normal(k4, (B2, C2), dtype=jnp.float32).astype(jnp.bfloat16)
    l1_2 = (jax.random.normal(k5, (B2,), dtype=jnp.float32) * 6.0).astype(jnp.bfloat16)
    label2 = (jax.random.uniform(k6, (B2, C2)) > 0.5).astype(jnp.bfloat16)

    results2 = {"fc": fc2, "layer1_fc": l1_2}
    batch2 = {"label": label2}

    out2 = jax.block_until_ready(loss_v3(results2, batch2, epoch=0, tile_b=128))
    ref2 = _reference(results2, batch2)
    for name in ("mse", "focal", "acc", "total"):
        np.testing.assert_allclose(np.asarray(out2[name]), np.asarray(ref2[name]),
                                   rtol=2e-4, atol=2e-4)

    print("KERNEL_OK")
</pallas_src>

<mosaic_0001>
module attributes {stable_mosaic.version = 11 : i64} {
  func.func @kernel(%arg0: i32, %arg1: memref<4x16xf32, #tpu.memory_space<vmem>>, %arg2: memref<4x16xf32, #tpu.memory_space<vmem>>, %arg3: memref<4x1xf32, #tpu.memory_space<vmem>>, %arg4: memref<4xf32, #tpu.memory_space<smem>>) attributes {dimension_semantics = [#tpu.dimension_semantics<arbitrary>], iteration_bounds = array<i64: 1>, scalar_prefetch = 0 : i64, scratch_operands = 0 : i64, tpu.core_type = #tpu.core_type<tc>, window_params = [{transform_indices = @transform_0, window_bounds = array<i64: 4, 16>}, {transform_indices = @transform_1, window_bounds = array<i64: 4, 16>}, {transform_indices = @transform_2, window_bounds = array<i64: 4, 1>}, {transform_indices = @transform_3, window_bounds = array<i64: 4>}]} {
    %c0_i32 = arith.constant 0 : i32
    %0 = arith.cmpi eq, %arg0, %c0_i32 : i32
    %1 = arith.extui %0 : i1 to i32
    %c0_i32_0 = arith.constant 0 : i32
    %2 = arith.cmpi ne, %1, %c0_i32_0 : i32
    scf.if %2 {
      %cst_24 = arith.constant 0.000000e+00 : f32
      %c0_25 = arith.constant 0 : index
      %65 = memref.load %arg4[%c0_25] : memref<4xf32, #tpu.memory_space<smem>>
      memref.store %cst_24, %arg4[%c0_25] : memref<4xf32, #tpu.memory_space<smem>>
      %cst_26 = arith.constant 0.000000e+00 : f32
      %c1_27 = arith.constant 1 : index
      %66 = memref.load %arg4[%c1_27] : memref<4xf32, #tpu.memory_space<smem>>
      memref.store %cst_26, %arg4[%c1_27] : memref<4xf32, #tpu.memory_space<smem>>
      %cst_28 = arith.constant 0.000000e+00 : f32
      %c2_29 = arith.constant 2 : index
      %67 = memref.load %arg4[%c2_29] : memref<4xf32, #tpu.memory_space<smem>>
      memref.store %cst_28, %arg4[%c2_29] : memref<4xf32, #tpu.memory_space<smem>>
      %cst_30 = arith.constant 0.000000e+00 : f32
      %c3 = arith.constant 3 : index
      %68 = memref.load %arg4[%c3] : memref<4xf32, #tpu.memory_space<smem>>
      memref.store %cst_30, %arg4[%c3] : memref<4xf32, #tpu.memory_space<smem>>
    } else {
    }
    %c0 = arith.constant 0 : index
    %c0_1 = arith.constant 0 : index
    %3 = vector.load %arg1[%c0, %c0_1] : memref<4x16xf32, #tpu.memory_space<vmem>>, vector<4x16xf32>
    %c0_2 = arith.constant 0 : index
    %c0_3 = arith.constant 0 : index
    %4 = vector.load %arg2[%c0_2, %c0_3] : memref<4x16xf32, #tpu.memory_space<vmem>>, vector<4x16xf32>
    %c0_4 = arith.constant 0 : index
    %c0_5 = arith.constant 0 : index
    %5 = vector.load %arg3[%c0_4, %c0_5] : memref<4x1xf32, #tpu.memory_space<vmem>>, vector<4x1xf32>
    %cst = arith.constant 2.000000e+00 : f32
    %6 = vector.broadcast %cst : f32 to vector<4x16xf32>
    %7 = arith.mulf %4, %6 : vector<4x16xf32>
    %cst_6 = arith.constant 1.000000e+00 : f32
    %8 = vector.broadcast %cst_6 : f32 to vector<4x16xf32>
    %9 = arith.subf %7, %8 : vector<4x16xf32>
    %10 = arith.mulf %3, %9 : vector<4x16xf32>
    %11 = math.absf %10 : vector<4x16xf32>
    %cst_7 = arith.constant 0.000000e+00 : f32
    %12 = vector.broadcast %cst_7 : f32 to vector<4x16xf32>
    %13 = arith.subf %12, %11 : vector<4x16xf32>
    %14 = math.exp %13 : vector<4x16xf32>
    %cst_8 = arith.constant 0.000000e+00 : f32
    %15 = vector.broadcast %cst_8 : f32 to vector<4x16xf32>
    %16 = arith.maximumf %10, %15 : vector<4x16xf32>
    %17 = math.log1p %14 : vector<4x16xf32>
    %18 = arith.addf %16, %17 : vector<4x16xf32>
    %19 = arith.subf %18, %10 : vector<4x16xf32>
    %cst_9 = arith.constant -2.000000e+00 : f32
    %20 = vector.broadcast %cst_9 : f32 to vector<4x16xf32>
    %21 = arith.mulf %20, %18 : vector<4x16xf32>
    %22 = math.exp %21 : vector<4x16xf32>
    %23 = arith.mulf %22, %19 : vector<4x16xf32>
    %cst_10 = arith.constant 0.000000e+00 : f32
    %24 = vector.broadcast %cst_10 : f32 to vector<4x16xf32>
    %25 = arith.cmpf ogt, %3, %24 : vector<4x16xf32>
    %cst_11 = arith.constant 5.000000e-01 : f32
    %26 = vector.broadcast %cst_11 : f32 to vector<4x16xf32>
    %27 = arith.cmpf ogt, %4, %26 : vector<4x16xf32>
    %28 = arith.xori %25, %27 : vector<4x16xi1>
    %cst_12 = arith.constant dense<true> : vector<4x16xi1>
    %29 = arith.xori %28, %cst_12 : vector<4x16xi1>
    %30 = arith.extui %29 : vector<4x16xi1> to vector<4x16xi32>
    %31 = arith.sitofp %30 : vector<4x16xi32> to vector<4x16xf32>
    %cst_13 = arith.constant 0.000000e+00 : f32
    %32 = vector.broadcast %cst_13 : f32 to vector<4x16xf32>
    %33 = arith.cmpf olt, %4, %32 : vector<4x16xf32>
    %34 = math.ceil %4 : vector<4x16xf32>
    %35 = math.floor %4 : vector<4x16xf32>
    %36 = arith.select %33, %34, %35 : vector<4x16xi1>, vector<4x16xf32>
    %cst_14 = arith.constant dense<0.000000e+00> : vector<4xf32>
    %37 = vector.multi_reduction <add>, %36, %cst_14 [1] : vector<4x16xf32> to vector<4xf32>
    %38 = vector.shape_cast %37 : vector<4xf32> to vector<4x1xf32>
    %39 = arith.subf %5, %38 : vector<4x1xf32>
    %c0_15 = arith.constant 0 : index
    %40 = memref.load %arg4[%c0_15] : memref<4xf32, #tpu.memory_space<smem>>
    %41 = arith.mulf %39, %39 : vector<4x1xf32>
    %42 = vector.shape_cast %41 : vector<4x1xf32> to vector<1x4x1xf32>
    %cst_16 = arith.constant dense<0.000000e+00> : vector<1xf32>
    %43 = vector.multi_reduction <add>, %42, %cst_16 [1, 2] : vector<1x4x1xf32> to vector<1xf32>
    %44 = vector.shape_cast %43 : vector<1xf32> to vector<1x1x1xf32>
    %45 = vector.extract %44[0, 0, 0] : f32 from vector<1x1x1xf32>
    %46 = arith.addf %40, %45 : f32
    %c0_17 = arith.constant 0 : index
    %47 = memref.load %arg4[%c0_17] : memref<4xf32, #tpu.memory_space<smem>>
    memref.store %46, %arg4[%c0_17] : memref<4xf32, #tpu.memory_space<smem>>
    %c1 = arith.constant 1 : index
    %48 = memref.load %arg4[%c1] : memref<4xf32, #tpu.memory_space<smem>>
    %49 = vector.shape_cast %23 : vector<4x16xf32> to vector<1x4x16xf32>
    %cst_18 = arith.constant dense<0.000000e+00> : vector<1xf32>
    %50 = vector.multi_reduction <add>, %49, %cst_18 [1, 2] : vector<1x4x16xf32> to vector<1xf32>
    %51 = vector.shape_cast %50 : vector<1xf32> to vector<1x1x1xf32>
    %52 = vector.extract %51[0, 0, 0] : f32 from vector<1x1x1xf32>
    %53 = arith.addf %48, %52 : f32
    %c1_19 = arith.constant 1 : index
    %54 = memref.load %arg4[%c1_19] : memref<4xf32, #tpu.memory_space<smem>>
    memref.store %53, %arg4[%c1_19] : memref<4xf32, #tpu.memory_space<smem>>
    %c2 = arith.constant 2 : index
    %55 = memref.load %arg4[%c2] : memref<4xf32, #tpu.memory_space<smem>>
    %56 = vector.shape_cast %31 : vector<4x16xf32> to vector<1x4x16xf32>
    %cst_20 = arith.constant dense<0.000000e+00> : vector<1xf32>
    %57 = vector.multi_reduction <add>, %56, %cst_20 [1, 2] : vector<1x4x16xf32> to vector<1xf32>
    %58 = vector.shape_cast %57 : vector<1xf32> to vector<1x1x1xf32>
    %59 = vector.extract %58[0, 0, 0] : f32 from vector<1x1x1xf32>
    %60 = arith.addf %55, %59 : f32
    %c2_21 = arith.constant 2 : index
    %61 = memref.load %arg4[%c2_21] : memref<4xf32, #tpu.memory_space<smem>>
    memref.store %60, %arg4[%c2_21] : memref<4xf32, #tpu.memory_space<smem>>
    %c0_i32_22 = arith.constant 0 : i32
    %62 = arith.cmpi eq, %arg0, %c0_i32_22 : i32
    %63 = arith.extui %62 : i1 to i32
    %c0_i32_23 = arith.constant 0 : i32
    %64 = arith.cmpi ne, %63, %c0_i32_23 : i32
    scf.if %64 {
      %c0_24 = arith.constant 0 : index
      %65 = memref.load %arg4[%c0_24] : memref<4xf32, #tpu.memory_space<smem>>
      %cst_25 = arith.constant 2.500000e-01 : f32
      %66 = arith.mulf %65, %cst_25 : f32
      %c1_26 = arith.constant 1 : index
      %67 = memref.load %arg4[%c1_26] : memref<4xf32, #tpu.memory_space<smem>>
      %cst_27 = arith.constant 2.500000e-01 : f32
      %68 = arith.mulf %67, %cst_27 : f32
      %c2_28 = arith.constant 2 : index
      %69 = memref.load %arg4[%c2_28] : memref<4xf32, #tpu.memory_space<smem>>
      %cst_29 = arith.constant 1.562500e-02 : f32
      %70 = arith.mulf %69, %cst_29 : f32
      %c0_30 = arith.constant 0 : index
      %71 = memref.load %arg4[%c0_30] : memref<4xf32, #tpu.memory_space<smem>>
      memref.store %66, %arg4[%c0_30] : memref<4xf32, #tpu.memory_space<smem>>
      %c1_31 = arith.constant 1 : index
      %72 = memref.load %arg4[%c1_31] : memref<4xf32, #tpu.memory_space<smem>>
      memref.store %68, %arg4[%c1_31] : memref<4xf32, #tpu.memory_space<smem>>
      %c2_32 = arith.constant 2 : index
      %73 = memref.load %arg4[%c2_32] : memref<4xf32, #tpu.memory_space<smem>>
      memref.store %70, %arg4[%c2_32] : memref<4xf32, #tpu.memory_space<smem>>
      %74 = arith.addf %68, %66 : f32
      %c3 = arith.constant 3 : index
      %75 = memref.load %arg4[%c3] : memref<4xf32, #tpu.memory_space<smem>>
      memref.store %74, %arg4[%c3] : memref<4xf32, #tpu.memory_space<smem>>
    } else {
    }
    return
  }
  func.func @transform_0(%arg0: i32) -> (i32, i32) {
    %c0_i32 = arith.constant 0 : i32
    %c0_i32_0 = arith.constant 0 : i32
    return %arg0, %c0_i32 : i32, i32
  }
  func.func @transform_1(%arg0: i32) -> (i32, i32) {
    %c0_i32 = arith.constant 0 : i32
    %c0_i32_0 = arith.constant 0 : i32
    return %arg0, %c0_i32 : i32, i32
  }
  func.func @transform_2(%arg0: i32) -> (i32, i32) {
    %c0_i32 = arith.constant 0 : i32
    %c0_i32_0 = arith.constant 0 : i32
    return %arg0, %c0_i32 : i32, i32
  }
  func.func @transform_3(%arg0: i32) -> i32 {
    %c0_i32 = arith.constant 0 : i32
    %c0_i32_0 = arith.constant 0 : i32
    return %c0_i32 : i32
  }
}

</mosaic_0001>

<llo_original>
// kernel: tpu_custom_call.1
$region0: #{tpu_custom_call.1}
  #allocation0 [shape = 'u32[]', space=smem, size = 0x4, offset = 0x4, fixed_abs, tag = 'smem constant byte address 0x4 - core index']
  #allocation1 [shape = 'u32[144,128]{1,0:T(1,128)}', space=vmem, size = 0x12000, scoped, tag = 'internal scratch']
  %s0 = inlined_call_operand.vmem [shape: f32[4,16], index: 0, kind: input, shape index: {}]
  %s1 = inlined_call_operand.hbm [shape: f32[4,16], index: 1, kind: input, shape index: {}]
  %s2 = inlined_call_operand.vmem [shape: f32[4,1], index: 2, kind: input, shape index: {}]
  %s3 = inlined_call_operand.hbm [shape: f32[4], index: 3, kind: output, shape index: {}]
  %s4 = sld [smem:[#allocation0]]
  $region34: #{tpu_custom_call.1} parent=0
    _
  %s6 = ssub.s32 1, %s4
  %s7 = scalar_select 0, %s6, %s4
  $region1: #{tpu_custom_call.1} parent=0
    #allocation2 [shape = 'u8[2048]{0}', space=vmem, size = 0x800, scoped, tag = 'input window, operand 1, single buffered']
    #allocation3 [shape = 's32[1]{0}', space=sflag, size = 0x4, scoped, tag = 'scoped memory for tpu_custom_call.1']
    #allocation4 [shape = 's32[1]{0}', space=sflag, size = 0x4, scoped, tag = 'scoped memory for tpu_custom_call.1']
    #allocation5 [shape = 'u8[512]{0}', space=smem, size = 0x200, scoped, tag = 'output window, operand 0, single buffered']
    %8 = vsyncpa [#allocation3], 0
    %9 = vsyncpa [#allocation4], 0
    // Predicated region
    $region2: #{tpu_custom_call.1} parent=1 // pred_check
      _
    $region3: #{tpu_custom_call.1} parent=1 // pred_check_branch
      %11 = sbr.rel (0) target = $region5
    $region4: #{tpu_custom_call.1} parent=1 // pred_region
      _
    $region5: #{tpu_custom_call.1} parent=1 // pred_fallthru
      _
    // Predicated region
    $region6: #{tpu_custom_call.1} parent=1 // pred_check
      _
    $region7: #{tpu_custom_call.1} parent=1 // pred_check_branch
      %13 = sbr.rel (0) target = $region9
    $region8: #{tpu_custom_call.1} parent=1 // pred_region
      %s15 = ssub.s32 64, 64
      %16 = vsyncadd [#allocation3], %s15
      %s18 = sshll.u32 [#allocation2], 4
      %s19 = int_to_ptr.vmem [resolvable:$true] %s18
      %21 = dma.hbm_to_vmem [thread:$0]  %s1, 64, %s19, [#allocation3]
    $region9: #{tpu_custom_call.1} parent=1 // pred_fallthru
      _
    // Predicated region
    $region10: #{tpu_custom_call.1} parent=1 // pred_check
      _
    $region11: #{tpu_custom_call.1} parent=1 // pred_check_branch
      %23 = sbr.rel (0) target = $region13
    $region12: #{tpu_custom_call.1} parent=1 // pred_region
      _
    $region13: #{tpu_custom_call.1} parent=1 // pred_fallthru
      _
    // Predicated region
    $region14: #{tpu_custom_call.1} parent=1 // pred_check
      _
    $region15: #{tpu_custom_call.1} parent=1 // pred_check_branch
      %25 = sbr.rel (0) target = $region17
    $region16: #{tpu_custom_call.1} parent=1 // pred_region
      %26 = dma.done [#allocation3], 64
    $region17: #{tpu_custom_call.1} parent=1 // pred_fallthru
      _
    %p27 = scmp.eq.s32.totalorder 0, 0
    // Predicated region
    $region18: #{tpu_custom_call.1} parent=1 // pred_check
      %p28 = pneg %p27
    $region19: #{tpu_custom_call.1} parent=1 // pred_check_branch
      %30 = sbr.rel (%p28) target = $region21
    $region20: #{tpu_custom_call.1} parent=1 // pred_region
      %s31 = scalar_lea.smem [#allocation5], 0
      %32 = sst [smem:[%s31]] 0.0
      %s33 = scalar_lea.smem [#allocation5], 1
      %34 = sst [smem:[%s33]] 0.0
      %s35 = scalar_lea.smem [#allocation5], 2
      %36 = sst [smem:[%s35]] 0.0
      %s37 = scalar_lea.smem [#allocation5], 3
      %38 = sst [smem:[%s37]] 0.0
    $region21: #{tpu_custom_call.1} parent=1 // pred_fallthru
      _
    %v39 = vld [vmem:[%s0] sm:$0xf]
    %v40 = vld [vmem:[#allocation2] sm:$0xf]
    %v41 = vld [vmem:[%s2] sm:$0xf]
    %v42 = vmul.f32 %v40, 2.0
    %v43 = vsub.f32 %v42, 1.0
    %v44 = vmul.f32 %v39, %v43
    %v45 = vand.u32 2147483647, %v44
    %v46 = vsub.f32 0.0, %v45
    %v47 = vmul.f32 %v46, 1.442695
    %v48 = vpow.pop %v47
    %v49 = vmax.f32 %v44, 0.0
    %v50 = vadd.f32 %v48, 1.0
    %v51 = vlog2.pop %v50
    %v52 = vmul.f32 %v51, 0.6931472
    %v53 = vmul.f32 -0.5, %v48
    %v54 = vadd.f32 %v53, 1.0
    %v55 = vmul.f32 %v54, %v48
    %v56 = vand.u32 2147483647, %v48
    %vm57 = vcmp.lt.f32.partialorder %v56, 0.0004427343
    %v58 = vsel %vm57, %v55, %v52
    %v59 = vadd.f32 %v49, %v58
    %v60 = vsub.f32 %v59, %v44
    %v61 = vmul.f32 %v59, -2.0
    %v62 = vmul.f32 %v61, 1.442695
    %v63 = vpow.pop %v62
    %v64 = vmul.f32 %v63, %v60
    %vm65 = vcmp.gt.f32.partialorder %v39, 0.0
    %vm66 = vcmp.gt.f32.partialorder %v40, 0.5
    %vm67 = vmxor %vm65, %vm66
    %vm68 = vmxor %vm67, 1
    %v69 = vsel %vm68, 1, 0
    %v70 = vcvt.s32.f32 %v69
    %vm71 = vcmp.lt.f32.partialorder %v40, 0.0
    %v72 = vceil.f32 %v40
    %v73 = vfloor.f32 %v40
    %v74 = vsel %vm71, %v72, %v73
    %vm75 = vcmask 125952
    %v76 = vsel %vm75, %v74, 0.0
    %77 = vadd.xlane.f32.xlu0 %v76
    %v78 = vpop.xlane.xlu0 %77
    %v79 = vsub.f32 %v41, %v78
    %s80 = sld [smem:[#allocation5]]
    %v81 = vmul.f32 %v79, %v79
    %vm82 = vcmask 3072
    %v83 = vsel %vm82, %v81, 0.0
    %84 = vadd.xlane.f32.xlu0 %v83
    %v85 = vpop.xlane.xlu0 %84
    %v86 = vrot.slane %v85, 4
    %v87 = vadd.f32 %v85, %v86
    %v88 = vrot.slane %v87, 2
    %v89 = vadd.f32 %v87, %v88
    %v90 = vrot.slane %v89, 1
    %v91 = vadd.f32 %v89, %v90
    %s92 = vtos %v91
    %s93 = sadd.f32 %s80, %s92
    %s94 = scalar_lea.smem [#allocation5], 0
    %95 = sst [smem:[%s94]] %s93
    %s96 = sld [smem:[#allocation5 + $0x1]]
    %v97 = vsel %vm75, %v64, 0.0
    %98 = vadd.xlane.f32.xlu0 %v97
    %v99 = vpop.xlane.xlu0 %98
    %v100 = vrot.slane %v99, 4
    %v101 = vadd.f32 %v99, %v100
    %v102 = vrot.slane %v101, 2
    %v103 = vadd.f32 %v101, %v102
    %v104 = vrot.slane %v103, 1
    %v105 = vadd.f32 %v103, %v104
    %s106 = vtos %v105
    %s107 = sadd.f32 %s96, %s106
    %s108 = scalar_lea.smem [#allocation5], 1
    %109 = sst [smem:[%s108]] %s107
    %s110 = sld [smem:[#allocation5 + $0x2]]
    %v111 = vsel %vm75, %v70, 0.0
    %112 = vadd.xlane.f32.xlu0 %v111
    %v113 = vpop.xlane.xlu0 %112
    %v114 = vrot.slane %v113, 4
    %v115 = vadd.f32 %v113, %v114
    %v116 = vrot.slane %v115, 2
    %v117 = vadd.f32 %v115, %v116
    %v118 = vrot.slane %v117, 1
    %v119 = vadd.f32 %v117, %v118
    %s120 = vtos %v119
    %s121 = sadd.f32 %s110, %s120
    %s122 = scalar_lea.smem [#allocation5], 2
    %123 = sst [smem:[%s122]] %s121
    // Predicated region
    $region22: #{tpu_custom_call.1} parent=1 // pred_check
      %p124 = pneg %p27
    $region23: #{tpu_custom_call.1} parent=1 // pred_check_branch
      %126 = sbr.rel (%p124) target = $region25
    $region24: #{tpu_custom_call.1} parent=1 // pred_region
      %s127 = sld [smem:[#allocation5]]
      %s128 = smul.f32 %s127, 0.25
      %s129 = sld [smem:[#allocation5 + $0x1]]
      %s130 = smul.f32 %s129, 0.25
      %s131 = sld [smem:[#allocation5 + $0x2]]
      %s132 = smul.f32 %s131, 0.015625
      %133 = sst [smem:[%s94]] %s128
      %134 = sst [smem:[%s108]] %s130
      %135 = sst [smem:[%s122]] %s132
      %s136 = sadd.f32 %s130, %s128
      %s137 = scalar_lea.smem [#allocation5], 3
      %138 = sst [smem:[%s137]] %s136
    $region25: #{tpu_custom_call.1} parent=1 // pred_fallthru
      _
    // Predicated region
    $region26: #{tpu_custom_call.1} parent=1 // pred_check
      _
    $region27: #{tpu_custom_call.1} parent=1 // pred_check_branch
      %140 = sbr.rel (0) target = $region29
    $region28: #{tpu_custom_call.1} parent=1 // pred_region
      %s142 = ssub.s32 16, 16
      %143 = vsyncadd [#allocation4], %s142
      %146 = dma.smem_to_hbm [#allocation5], 16, %s3, [#allocation4]
    $region29: #{tpu_custom_call.1} parent=1 // pred_fallthru
      _
    // Predicated region
    $region30: #{tpu_custom_call.1} parent=1 // pred_check
      _
    $region31: #{tpu_custom_call.1} parent=1 // pred_check_branch
      %148 = sbr.rel (0) target = $region33
    $region32: #{tpu_custom_call.1} parent=1 // pred_region
      %149 = dma.done [#allocation4], 16
    $region33: #{tpu_custom_call.1} parent=1 // pred_fallthru
      _
    %150 = sfence
    %151 = vsyncpa [#allocation3], 1
    %152 = vsyncpa [#allocation4], 1

</llo_original>
